<compile_context>
chip_gen: v7x
topology: tpu7x:2x2x1
jax: 0.10.0
libtpu: 0.0.40
codegen_flags: <defaults>
</compile_context>

<pallas_src>
import jax
import jax.numpy as jnp
from jax.experimental import pallas as pl
from jax.experimental.pallas import tpu as pltpu

INPUT_SIZE = 1
OUTPUT_SIZE = 1

LANES = 128            # vreg lane width (fast axis)
SUBLANES = 8           # f32 sublane tiling (second-to-last dim)
MAX_TILE_ROWS = 4096   # 4096 * 128 * 4 B = 2 MiB per block


def _round_up(n, m):
    return ((n + m - 1) // m) * m


def linear_kernel(params_ref, x_ref, o_ref):
    # params_ref: SMEM (2,) f32 -> [w, b]
    # x_ref / o_ref: VMEM (tile_rows, 128) lane-dense tiles.
    w = params_ref[0]
    b = params_ref[1]
    # Single VPU elementwise FMA; no MXU, no masked partial stores.
    o_ref[...] = (x_ref[...] * w + b).astype(o_ref.dtype)


def pack_params(weight, bias):
    """One-time packing of nn.Linear params -> (2,) f32 [w, b].

    Hoisted out of the per-call forward path (perf feedback): call once at model
    load time, reuse the packed array for every forward.
    """
    return jnp.concatenate([weight.reshape(-1), bias.reshape(-1)]).astype(jnp.float32)


@jax.jit
def linear_forward(x, params):
    """x: [B, 1], params: (2,) f32 packed [w, b] -> out: [B, 1]."""
    B, in_features = x.shape
    assert in_features == INPUT_SIZE
    dtype = x.dtype
    if B == 0:
        return jnp.zeros((0, OUTPUT_SIZE), dtype)

    # Lane-dense view: flatten [B,1] -> [B]; pad ONLY if B is not already a
    # multiple of 8*128 (sublane x lane), then view as (rows, 128).
    flat = x.reshape(-1)
    rows = _round_up(pl.cdiv(B, LANES), SUBLANES)
    padded = rows * LANES
    if padded != B:
        flat = jnp.pad(flat, (0, padded - B))
    x2d = flat.reshape(rows, LANES)

    # Tile selection: ~2 MiB blocks to amortize per-step overhead, but guarantee
    # >= 2 grid steps when there is enough work so both v7x TensorCores run.
    if rows >= 2 * SUBLANES:
        tile_rows = min(MAX_TILE_ROWS, _round_up(pl.cdiv(rows, 2), SUBLANES))
    else:
        tile_rows = rows
    # Last block may be ragged (rows % tile_rows != 0): elementwise op, OOB
    # output rows are dropped by Pallas, so no rounding-up / extra copies needed.
    grid = (pl.cdiv(rows, tile_rows),)

    out2d = pl.pallas_call(
        linear_kernel,
        out_shape=jax.ShapeDtypeStruct((rows, LANES), dtype),
        grid_spec=pltpu.PrefetchScalarGridSpec(
            num_scalar_prefetch=0,
            grid=grid,
            in_specs=[
                # Whole (2,) parameter vector, untiled, in scalar memory.
                pl.BlockSpec(memory_space=pltpu.MemorySpace.SMEM),
                # Lane-dense row tiles of the input.
                pl.BlockSpec((tile_rows, LANES), lambda i: (i, 0)),
            ],
            out_specs=pl.BlockSpec((tile_rows, LANES), lambda i: (i, 0)),
        ),
        compiler_params=pltpu.CompilerParams(
            # Independent row tiles: lets v7x shard across its 2 TensorCores.
            dimension_semantics=("parallel",),
        ),
    )(params, x2d)

    # Restore the [B, 1] output layout; the slice only exists when we padded.
    out_flat = out2d.reshape(-1)
    if padded != B:
        out_flat = out_flat[:B]
    return out_flat.reshape(B, OUTPUT_SIZE)


if __name__ == "__main__":
    # NOTE: at B=8 a standalone pallas_call is launch-overhead dominated; this is
    # a correctness demo.  The tiling above pays off for large-batch inference.
    key = jax.random.PRNGKey(0)
    kx, kw, kb = jax.random.split(key, 3)

    batch = 8
    # Deterministic init mirroring nn.Linear's uniform(-1/sqrt(in), 1/sqrt(in)).
    bound = 1.0 / (INPUT_SIZE ** 0.5)
    weight = jax.random.uniform(kw, (OUTPUT_SIZE, INPUT_SIZE),
                                minval=-bound, maxval=bound, dtype=jnp.float32)
    bias = jax.random.uniform(kb, (OUTPUT_SIZE,),
                              minval=-bound, maxval=bound, dtype=jnp.float32)

    x = jax.random.normal(kx, (batch, INPUT_SIZE), dtype=jnp.float32)

    # Pack parameters once (outside the per-call path), then run the forward.
    params = pack_params(weight, bias)
    out = linear_forward(x, params)
    out = jax.block_until_ready(out)

    # Reference check in plain JAX.
    ref = x @ weight.T + bias
    assert out.shape == (batch, OUTPUT_SIZE)
    assert jnp.allclose(out, ref, atol=1e-5, rtol=1e-5)

    print("KERNEL_OK")
</pallas_src>

<mosaic_0001>
module attributes {stable_mosaic.version = 11 : i64} {
  func.func @linear_kernel(%arg0: i32, %arg1: memref<2xf32, #tpu.memory_space<smem>>, %arg2: memref<8x128xf32, #tpu.memory_space<vmem>>, %arg3: memref<8x128xf32, #tpu.memory_space<vmem>>) attributes {dimension_semantics = [#tpu.dimension_semantics<parallel>], iteration_bounds = array<i64: 1>, scalar_prefetch = 0 : i64, scratch_operands = 0 : i64, tpu.core_type = #tpu.core_type<tc>, window_params = [{transform_indices = @transform_0, window_bounds = array<i64: 2>}, {transform_indices = @transform_1, window_bounds = array<i64: 8, 128>}, {transform_indices = @transform_2, window_bounds = array<i64: 8, 128>}]} {
    %c0 = arith.constant 0 : index
    %0 = memref.load %arg1[%c0] : memref<2xf32, #tpu.memory_space<smem>>
    %c1 = arith.constant 1 : index
    %1 = memref.load %arg1[%c1] : memref<2xf32, #tpu.memory_space<smem>>
    %c0_0 = arith.constant 0 : index
    %c0_1 = arith.constant 0 : index
    %2 = vector.load %arg2[%c0_0, %c0_1] : memref<8x128xf32, #tpu.memory_space<vmem>>, vector<8x128xf32>
    %3 = vector.broadcast %0 : f32 to vector<8x128xf32>
    %4 = arith.mulf %2, %3 : vector<8x128xf32>
    %5 = vector.broadcast %1 : f32 to vector<8x128xf32>
    %6 = arith.addf %4, %5 : vector<8x128xf32>
    %c0_2 = arith.constant 0 : index
    %c0_3 = arith.constant 0 : index
    %7 = vector.load %arg3[%c0_2, %c0_3] : memref<8x128xf32, #tpu.memory_space<vmem>>, vector<8x128xf32>
    tpu.vector_store %arg3[%c0_2, %c0_3], %6 {strides = array<i32>} : memref<8x128xf32, #tpu.memory_space<vmem>>, vector<8x128xf32>,
    return
  }
  func.func @transform_0(%arg0: i32) -> i32 {
    %c0_i32 = arith.constant 0 : i32
    %c0_i32_0 = arith.constant 0 : i32
    return %c0_i32 : i32
  }
  func.func @transform_1(%arg0: i32) -> (i32, i32) {
    %c0_i32 = arith.constant 0 : i32
    %c0_i32_0 = arith.constant 0 : i32
    return %arg0, %c0_i32 : i32, i32
  }
  func.func @transform_2(%arg0: i32) -> (i32, i32) {
    %c0_i32 = arith.constant 0 : i32
    %c0_i32_0 = arith.constant 0 : i32
    return %arg0, %c0_i32 : i32, i32
  }
}

</mosaic_0001>

<llo_original>
// kernel: linear_forward.1
$region0: #{linear_forward.1}
  #allocation0 [shape = 'u32[]', space=smem, size = 0x4, offset = 0x4, fixed_abs, tag = 'smem constant byte address 0x4 - core index']
  #allocation1 [shape = 'u32[144,128]{1,0:T(1,128)}', space=vmem, size = 0x12000, scoped, tag = 'internal scratch']
  %s0 = inlined_call_operand.vmem [shape: f32[2], index: 0, kind: input, shape index: {}]
  %s1 = inlined_call_operand.vmem [shape: f32[8,128], index: 1, kind: input, shape index: {}]
  %s2 = inlined_call_operand.vmem [shape: f32[8,128], index: 2, kind: output, shape index: {}]
  %s3 = sld [smem:[#allocation0]]
  $region22: #{linear_forward.1} parent=0
    _
  %s5 = ssub.s32 1, %s3
  %s6 = scalar_select 0, %s5, %s3
  $region1: #{linear_forward.1} parent=0
    #allocation2 [shape = 'u8[512]{0}', space=smem, size = 0x200, scoped, tag = 'input window, operand 0, single buffered']
    #allocation3 [shape = 's32[1]{0}', space=sflag, size = 0x4, scoped, tag = 'scoped memory for linear_forward.1']
    %7 = vsyncpa [#allocation3], 0
    // Predicated region
    $region2: #{linear_forward.1} parent=1 // pred_check
      _
    $region3: #{linear_forward.1} parent=1 // pred_check_branch
      %9 = sbr.rel (0) target = $region5
    $region4: #{linear_forward.1} parent=1 // pred_region
      %s11 = ssub.s32 16, 16
      %12 = vsyncadd [#allocation3], %s11
      %s14 = sshll.u32 %s0, 4
      %s15 = int_to_ptr.vmem [resolvable:$true] %s14
      %17 = dma.vmem_to_smem %s15, 16, [#allocation2], [#allocation3]
    $region5: #{linear_forward.1} parent=1 // pred_fallthru
      _
    // Predicated region
    $region6: #{linear_forward.1} parent=1 // pred_check
      _
    $region7: #{linear_forward.1} parent=1 // pred_check_branch
      %19 = sbr.rel (0) target = $region9
    $region8: #{linear_forward.1} parent=1 // pred_region
      _
    $region9: #{linear_forward.1} parent=1 // pred_fallthru
      _
    // Predicated region
    $region10: #{linear_forward.1} parent=1 // pred_check
      _
    $region11: #{linear_forward.1} parent=1 // pred_check_branch
      %21 = sbr.rel (0) target = $region13
    $region12: #{linear_forward.1} parent=1 // pred_region
      %22 = dma.done [#allocation3], 16
    $region13: #{linear_forward.1} parent=1 // pred_fallthru
      _
    %23 = sfence
    %s24 = sld [smem:[#allocation2]]
    %s25 = sld [smem:[#allocation2 + $0x1]]
    %v26 = vld [vmem:[%s1] sm:$0xff]
    %v27 = vstv %s24
    %v28 = vmul.f32 %v26, %v27
    %v29 = vstv %s25
    %v30 = vadd.f32 %v28, %v29
    %31 = vst [vmem:[%s2] sm:$0xff] %v30
    // Predicated region
    $region14: #{linear_forward.1} parent=1 // pred_check
      _
    $region15: #{linear_forward.1} parent=1 // pred_check_branch
      %33 = sbr.rel (0) target = $region17
    $region16: #{linear_forward.1} parent=1 // pred_region
      _
    $region17: #{linear_forward.1} parent=1 // pred_fallthru
      _
    // Predicated region
    $region18: #{linear_forward.1} parent=1 // pred_check
      _
    $region19: #{linear_forward.1} parent=1 // pred_check_branch
      %35 = sbr.rel (0) target = $region21
    $region20: #{linear_forward.1} parent=1 // pred_region
      _
    $region21: #{linear_forward.1} parent=1 // pred_fallthru
      _
    %36 = vsyncpa [#allocation3], 1

</llo_original>
